<compile_context>
chip_gen: v7x
topology: tpu7x:2x2x1
jax: 0.10.0
libtpu: 0.0.40
codegen_flags: <defaults>
</compile_context>

<pallas_src>
import functools

import jax
import jax.numpy as jnp
from jax.experimental import pallas as pl
from jax.experimental.pallas import tpu as pltpu

_LANE = 128  # lane width (last dim)


def _round_up(x, m):
    return ((x + m - 1) // m) * m


def _sublane_rows(dtype):
    # Packed sublane tile height: 8 rows for 4-byte, 16 for 2-byte, 32 for 1-byte.
    return {4: 8, 2: 16, 1: 32}[jnp.dtype(dtype).itemsize]


def _fused_mlp_kernel(x_ref, *refs, n_hidden):
    """Whole-MLP forward for one batch tile.

    refs = (w0, b0, ..., w_{n_hidden-1}, b_{n_hidden-1}, w_head, b_head, o_ref)

    Hidden layers: MXU matmul (bf16/f32 inputs, f32 accumulate) + f32 bias +
    ReLU on the VPU.  Head Linear(H -> 1): VPU multiply + XLU lane reduction,
    stored lane-dense as a (1, 1, batch_tile) block (batch along lanes).
    """
    o_ref = refs[-1]
    layer_refs = refs[:-1]

    h = x_ref[...]
    for li in range(n_hidden):
        w_ref = layer_refs[2 * li]
        b_ref = layer_refs[2 * li + 1]
        y = jnp.dot(h.astype(w_ref.dtype), w_ref[...],
                    preferred_element_type=jnp.float32)
        h = jnp.maximum(y + b_ref[...], 0.0)          # f32 epilogue on the VPU

    w_head_ref = layer_refs[2 * n_hidden]             # (1, H_pad), f32
    b_head_ref = layer_refs[2 * n_hidden + 1]         # (1, 1),     f32
    v = jnp.sum(h * w_head_ref[...], axis=-1)         # (bt,) lane reduce (XLU)
    v = v.reshape(1, 1, -1) + b_head_ref[...]         # lane-dense (1, 1, bt)
    o_ref[...] = v.astype(o_ref.dtype)


def prepare_soft_critic_params(params, matmul_dtype=jnp.float32):
    """Pad/cast the parameters ONCE (hoist this out of the training loop).

    params: list of (w, b) with w stored as (in_features, out_features)
    (PyTorch Linear weights pre-transposed); the last layer has out=1.

    Returns a flat tuple (w0, b0, ..., w_head, b_head):
      * hidden weights: (K, N_pad) in `matmul_dtype` (K = obs_dim for layer 0,
        lane-padded hidden width afterwards); lane-padded with zeros only when
        needed (already-aligned weights pass through untouched).
      * hidden biases:  (1, N_pad) float32.
      * head: a (1, H_pad) float32 row + (1, 1) float32 bias, reduced on the
        VPU/XLU instead of a degenerate N=1 MXU matmul.

    matmul_dtype=jnp.bfloat16 is recommended on v5e/v6e/v7x (bf16-native MXU,
    half the resident-weight VMEM/HBM bytes); float32 gives exact parity.
    """
    assert len(params) >= 1 and params[-1][0].shape[1] == 1
    matmul_dtype = jnp.dtype(matmul_dtype)
    out = []
    prev = params[0][0].shape[0]          # obs_dim: first K stays unpadded
    for (w, b) in params[:-1]:
        d_in, d_out = w.shape
        d_out_pad = _round_up(d_out, _LANE)
        if (d_in, d_out) == (prev, d_out_pad) and w.dtype == matmul_dtype:
            w_p = jnp.asarray(w)                      # aligned: pass through
        else:
            w_p = jnp.zeros((prev, d_out_pad), matmul_dtype)
            w_p = w_p.at[:d_in, :d_out].set(jnp.asarray(w, matmul_dtype))
        b_p = jnp.zeros((1, d_out_pad), jnp.float32)
        b_p = b_p.at[0, :d_out].set(jnp.asarray(b, jnp.float32).reshape(-1))
        out += [w_p, b_p]
        prev = d_out_pad

    w_last, b_last = params[-1]
    w_head = jnp.zeros((1, prev), jnp.float32)
    w_head = w_head.at[0, :w_last.shape[0]].set(
        jnp.asarray(w_last, jnp.float32)[:, 0])
    b_head = jnp.asarray(b_last, jnp.float32).reshape(1, 1)
    return tuple(out + [w_head, b_head])


def soft_critic_forward(states, prepared_params, *, batch_tile=None,
                        single_buffer_weights=True):
    """SoftCritic.forward: fused MLP over `states`, returns (B, 1) float32.

    prepared_params: output of prepare_soft_critic_params().  The hidden
    weight dtype selects the MXU input dtype (bf16 recommended on all TPU
    generations; f32 accumulation keeps the epilogue exact either way).
    """
    x = jnp.asarray(states)
    B, obs_dim = x.shape
    n_hidden = (len(prepared_params) - 2) // 2
    matmul_dtype = prepared_params[0].dtype
    sub = _sublane_rows(matmul_dtype)

    # Batch tile: dtype-aware sublane rounding; default aims for >=2 grid
    # steps (so dimension_semantics=("parallel",) shards across both v7x
    # TensorCores) while capping at 512 rows to amortize ~0.35us/step.
    if batch_tile is None:
        if B <= 2 * sub:
            batch_tile = _round_up(B, sub)
        else:
            batch_tile = min(512, _round_up(-(-B // 2), sub))
    batch_tile = _round_up(batch_tile, sub)
    B_pad = _round_up(B, batch_tile)
    num_tiles = B_pad // batch_tile

    # x: cast to the matmul dtype; pad BATCH rows only.  Features stay at
    # obs_dim (a full-extent last dim is a legal block) so the one streamed
    # input is not inflated in HBM.
    x = x.astype(matmul_dtype)
    if B_pad != B:
        x = jnp.zeros((B_pad, obs_dim), matmul_dtype).at[:B].set(x)

    # Explicit VMEM budget: weights (x2 to also cover the double-buffered
    # fallback) + double-buffered x/out tiles + activation working set,
    # generous headroom, clamped to v7x's 64 MiB per TensorCore.
    itemsize = jnp.dtype(matmul_dtype).itemsize
    weight_bytes = sum(int(a.size) * a.dtype.itemsize for a in prepared_params)
    max_width = max(int(a.shape[-1]) for a in prepared_params)
    need = (2 * weight_bytes
            + 2 * batch_tile * obs_dim * itemsize
            + 2 * batch_tile * 4
            + 2 * batch_tile * max_width * 4)
    vmem_limit = int(min(2 * need + (8 << 20), 64 << 20))

    # Cost estimate: x streamed once, weights read once, output written once.
    flops = 0
    for li in range(n_hidden):
        w = prepared_params[2 * li]
        flops += 2 * B_pad * int(w.shape[0]) * int(w.shape[1])
    flops += 2 * B_pad * int(prepared_params[2 * n_hidden].shape[1])
    bytes_accessed = int(x.size) * itemsize + weight_bytes + B_pad * 4

    kernel = functools.partial(_fused_mlp_kernel, n_hidden=n_hidden)

    def _run(single_buffer):
        def w_spec(shape):
            if single_buffer:
                # Weights never change across the grid: single buffer them.
                return pl.BlockSpec(shape, lambda i: (0, 0),
                                    pipeline_mode=pl.Buffered(1))
            return pl.BlockSpec(shape, lambda i: (0, 0))

        in_specs = [pl.BlockSpec((batch_tile, obs_dim), lambda i: (i, 0))]
        in_specs += [w_spec(a.shape) for a in prepared_params]
        return pl.pallas_call(
            kernel,
            out_shape=jax.ShapeDtypeStruct((num_tiles, 1, batch_tile),
                                           jnp.float32),
            grid=(num_tiles,),
            in_specs=in_specs,
            # Lane-dense output block: one dense row per tile.
            out_specs=pl.BlockSpec((1, 1, batch_tile), lambda i: (i, 0, 0)),
            compiler_params=pltpu.CompilerParams(
                dimension_semantics=("parallel",),
                vmem_limit_bytes=vmem_limit),
            cost_estimate=pl.CostEstimate(flops=flops, transcendentals=0,
                                          bytes_accessed=bytes_accessed),
        )(x, *prepared_params)

    if single_buffer_weights:
        try:
            out = _run(True)
        except Exception:
            # pl.Buffered(1) not supported by this JAX build: fall back to the
            # default double-buffered (still VMEM-resident) weight specs.
            out = _run(False)
    else:
        out = _run(False)

    # (num_tiles, 1, batch_tile) -> flatten (row-major == batch order), drop
    # the batch padding, and restore out.view(out.size(0), -1) parity: (B, 1).
    return out.reshape(-1)[:B].reshape(B, 1)


def init_mlp_params(key, observation_dim, output_dim, layer_size, n_layers):
    """PyTorch-Linear-style init (uniform +/- 1/sqrt(fan_in)); weights (in, out)."""
    dims = [observation_dim] + [layer_size] * n_layers + [output_dim]
    params = []
    for li in range(len(dims) - 1):
        d_in, d_out = dims[li], dims[li + 1]
        key, kw, kb = jax.random.split(key, 3)
        bound = 1.0 / jnp.sqrt(jnp.float32(d_in))
        w = jax.random.uniform(kw, (d_in, d_out), jnp.float32, -bound, bound)
        b = jax.random.uniform(kb, (d_out,), jnp.float32, -bound, bound)
        params.append((w, b))
    return params


def soft_critic_forward_ref(states, params):
    h = jnp.asarray(states, jnp.float32)
    n = len(params)
    for li, (w, b) in enumerate(params):
        h = h @ w + b
        if li != n - 1:
            h = jnp.maximum(h, 0.0)
    return h.reshape(h.shape[0], -1)


if __name__ == "__main__":
    # Small shapes consistent with the module: flat observation-vector inputs.
    batch = 8
    observation_dim = 16
    layer_size = 32        # config.layer_size
    n_layers = 2           # config.n_layers

    key = jax.random.PRNGKey(0)
    key, k_states = jax.random.split(key)
    states = jax.random.normal(k_states, (batch, observation_dim), jnp.float32)
    params = init_mlp_params(key, observation_dim, 1, layer_size, n_layers)

    ref = soft_critic_forward_ref(states, params)

    # f32 matmul path: exact parity with the PyTorch module.
    prep_f32 = prepare_soft_critic_params(params, jnp.float32)
    out = jax.block_until_ready(soft_critic_forward(states, prep_f32))
    assert out.shape == (batch, 1), out.shape
    assert jnp.allclose(out, ref, atol=1e-5, rtol=1e-5), (out, ref)

    # bf16 MXU-input path (recommended on v5e/v6e/v7x): f32 accumulate +
    # f32 epilogue; 16-row sublane rounding is applied automatically.
    prep_bf16 = prepare_soft_critic_params(params, jnp.bfloat16)
    out_bf16 = jax.block_until_ready(soft_critic_forward(states, prep_bf16))
    assert out_bf16.shape == (batch, 1), out_bf16.shape
    assert jnp.allclose(out_bf16, ref, atol=5e-2, rtol=5e-2), (out_bf16, ref)

    # Ragged batch + multi-step "parallel" grid (exercises batch padding,
    # resident weights across steps, and the lane-dense output writeback).
    states2 = jax.random.normal(jax.random.PRNGKey(1),
                                (batch + 3, observation_dim), jnp.float32)
    out2 = jax.block_until_ready(
        soft_critic_forward(states2, prep_f32, batch_tile=8))
    ref2 = soft_critic_forward_ref(states2, params)
    assert out2.shape == (batch + 3, 1), out2.shape
    assert jnp.allclose(out2, ref2, atol=1e-5, rtol=1e-5), (out2, ref2)

    # TODO(synk): update_critic / hard_update / copy (Adam step, MSE loss,
    # target-network polyak copy) are training utilities, not the forward pass.
    print("KERNEL_OK")
</pallas_src>

<mosaic_0001>
module attributes {stable_mosaic.version = 11 : i64} {
  func.func @_fused_mlp_kernel(%arg0: i32, %arg1: memref<8x16xf32, #tpu.memory_space<vmem>>, %arg2: memref<16x128xf32, #tpu.memory_space<vmem>>, %arg3: memref<1x128xf32, #tpu.memory_space<vmem>>, %arg4: memref<128x128xf32, #tpu.memory_space<vmem>>, %arg5: memref<1x128xf32, #tpu.memory_space<vmem>>, %arg6: memref<1x128xf32, #tpu.memory_space<vmem>>, %arg7: memref<1x1xf32, #tpu.memory_space<vmem>>, %arg8: memref<1x1x8xf32, #tpu.memory_space<vmem>>) attributes {dimension_semantics = [#tpu.dimension_semantics<parallel>], iteration_bounds = array<i64: 1>, scalar_prefetch = 0 : i64, scratch_operands = 0 : i64, tpu.core_type = #tpu.core_type<tc>, window_params = [{transform_indices = @transform_0, window_bounds = array<i64: 8, 16>}, {pipeline_mode = #tpu.pipeline_mode<synchronous>, transform_indices = @transform_1, window_bounds = array<i64: 16, 128>}, {pipeline_mode = #tpu.pipeline_mode<synchronous>, transform_indices = @transform_2, window_bounds = array<i64: 1, 128>}, {pipeline_mode = #tpu.pipeline_mode<synchronous>, transform_indices = @transform_3, window_bounds = array<i64: 128, 128>}, {pipeline_mode = #tpu.pipeline_mode<synchronous>, transform_indices = @transform_4, window_bounds = array<i64: 1, 128>}, {pipeline_mode = #tpu.pipeline_mode<synchronous>, transform_indices = @transform_5, window_bounds = array<i64: 1, 128>}, {pipeline_mode = #tpu.pipeline_mode<synchronous>, transform_indices = @transform_6, window_bounds = array<i64: 1, 1>}, {transform_indices = @transform_7, window_bounds = array<i64: 1, 1, 8>}]} {
    %c0 = arith.constant 0 : index
    %c0_0 = arith.constant 0 : index
    %0 = vector.load %arg1[%c0, %c0_0] : memref<8x16xf32, #tpu.memory_space<vmem>>, vector<8x16xf32>
    %c0_1 = arith.constant 0 : index
    %c0_2 = arith.constant 0 : index
    %1 = vector.load %arg2[%c0_1, %c0_2] : memref<16x128xf32, #tpu.memory_space<vmem>>, vector<16x128xf32>
    %cst = arith.constant dense<0.000000e+00> : vector<8x128xf32>
    %2 = tpu.matmul %0, %1, %cst {dimension_numbers = #tpu.dot_dimension_numbers<[1], [0], [0], [1], [0, 0, 1, 1], [], []>} : vector<8x16xf32>, vector<16x128xf32>, vector<8x128xf32> -> vector<8x128xf32>
    %c0_3 = arith.constant 0 : index
    %c0_4 = arith.constant 0 : index
    %3 = vector.load %arg3[%c0_3, %c0_4] : memref<1x128xf32, #tpu.memory_space<vmem>>, vector<1x128xf32>
    %4 = vector.broadcast %3 : vector<1x128xf32> to vector<8x128xf32>
    %5 = arith.addf %2, %4 : vector<8x128xf32>
    %cst_5 = arith.constant 0.000000e+00 : f32
    %6 = vector.broadcast %cst_5 : f32 to vector<8x128xf32>
    %7 = arith.maximumf %5, %6 : vector<8x128xf32>
    %c0_6 = arith.constant 0 : index
    %c0_7 = arith.constant 0 : index
    %8 = vector.load %arg4[%c0_6, %c0_7] : memref<128x128xf32, #tpu.memory_space<vmem>>, vector<128x128xf32>
    %cst_8 = arith.constant dense<0.000000e+00> : vector<8x128xf32>
    %9 = tpu.matmul %7, %8, %cst_8 {dimension_numbers = #tpu.dot_dimension_numbers<[1], [0], [0], [1], [0, 0, 1, 1], [], []>} : vector<8x128xf32>, vector<128x128xf32>, vector<8x128xf32> -> vector<8x128xf32>
    %c0_9 = arith.constant 0 : index
    %c0_10 = arith.constant 0 : index
    %10 = vector.load %arg5[%c0_9, %c0_10] : memref<1x128xf32, #tpu.memory_space<vmem>>, vector<1x128xf32>
    %11 = vector.broadcast %10 : vector<1x128xf32> to vector<8x128xf32>
    %12 = arith.addf %9, %11 : vector<8x128xf32>
    %cst_11 = arith.constant 0.000000e+00 : f32
    %13 = vector.broadcast %cst_11 : f32 to vector<8x128xf32>
    %14 = arith.maximumf %12, %13 : vector<8x128xf32>
    %c0_12 = arith.constant 0 : index
    %c0_13 = arith.constant 0 : index
    %15 = vector.load %arg6[%c0_12, %c0_13] : memref<1x128xf32, #tpu.memory_space<vmem>>, vector<1x128xf32>
    %16 = vector.broadcast %15 : vector<1x128xf32> to vector<8x128xf32>
    %17 = arith.mulf %14, %16 : vector<8x128xf32>
    %cst_14 = arith.constant dense<0.000000e+00> : vector<8xf32>
    %18 = vector.multi_reduction <add>, %17, %cst_14 [1] : vector<8x128xf32> to vector<8xf32>
    %19 = vector.shape_cast %18 : vector<8xf32> to vector<1x1x8xf32>
    %c0_15 = arith.constant 0 : index
    %c0_16 = arith.constant 0 : index
    %20 = vector.load %arg7[%c0_15, %c0_16] : memref<1x1xf32, #tpu.memory_space<vmem>>, vector<1x1xf32>
    %21 = vector.shape_cast %20 : vector<1x1xf32> to vector<1x1x1xf32>
    %22 = vector.broadcast %21 : vector<1x1x1xf32> to vector<1x1x8xf32>
    %23 = arith.addf %19, %22 : vector<1x1x8xf32>
    %c0_17 = arith.constant 0 : index
    %c0_18 = arith.constant 0 : index
    %c0_19 = arith.constant 0 : index
    %24 = vector.load %arg8[%c0_17, %c0_18, %c0_19] : memref<1x1x8xf32, #tpu.memory_space<vmem>>, vector<1x1x8xf32>
    tpu.vector_store %arg8[%c0_17, %c0_18, %c0_19], %23 {strides = array<i32>} : memref<1x1x8xf32, #tpu.memory_space<vmem>>, vector<1x1x8xf32>,
    return
  }
  func.func @transform_0(%arg0: i32) -> (i32, i32) {
    %c0_i32 = arith.constant 0 : i32
    %c0_i32_0 = arith.constant 0 : i32
    return %arg0, %c0_i32 : i32, i32
  }
  func.func @transform_1(%arg0: i32) -> (i32, i32) {
    %c0_i32 = arith.constant 0 : i32
    %c0_i32_0 = arith.constant 0 : i32
    %c0_i32_1 = arith.constant 0 : i32
    return %c0_i32, %c0_i32_0 : i32, i32
  }
  func.func @transform_2(%arg0: i32) -> (i32, i32) {
    %c0_i32 = arith.constant 0 : i32
    %c0_i32_0 = arith.constant 0 : i32
    %c0_i32_1 = arith.constant 0 : i32
    return %c0_i32, %c0_i32_0 : i32, i32
  }
  func.func @transform_3(%arg0: i32) -> (i32, i32) {
    %c0_i32 = arith.constant 0 : i32
    %c0_i32_0 = arith.constant 0 : i32
    %c0_i32_1 = arith.constant 0 : i32
    return %c0_i32, %c0_i32_0 : i32, i32
  }
  func.func @transform_4(%arg0: i32) -> (i32, i32) {
    %c0_i32 = arith.constant 0 : i32
    %c0_i32_0 = arith.constant 0 : i32
    %c0_i32_1 = arith.constant 0 : i32
    return %c0_i32, %c0_i32_0 : i32, i32
  }
  func.func @transform_5(%arg0: i32) -> (i32, i32) {
    %c0_i32 = arith.constant 0 : i32
    %c0_i32_0 = arith.constant 0 : i32
    %c0_i32_1 = arith.constant 0 : i32
    return %c0_i32, %c0_i32_0 : i32, i32
  }
  func.func @transform_6(%arg0: i32) -> (i32, i32) {
    %c0_i32 = arith.constant 0 : i32
    %c0_i32_0 = arith.constant 0 : i32
    %c0_i32_1 = arith.constant 0 : i32
    return %c0_i32, %c0_i32_0 : i32, i32
  }
  func.func @transform_7(%arg0: i32) -> (i32, i32, i32) {
    %c0_i32 = arith.constant 0 : i32
    %c0_i32_0 = arith.constant 0 : i32
    %c0_i32_1 = arith.constant 0 : i32
    return %arg0, %c0_i32, %c0_i32_0 : i32, i32, i32
  }
}

module attributes {stable_mosaic.version = 11 : i64} {
  func.func @_fused_mlp_kernel(%arg0: i32, %arg1: memref<8x16xf32, #tpu.memory_space<vmem>>, %arg2: memref<16x128xf32, #tpu.memory_space<vmem>>, %arg3: memref<1x128xf32, #tpu.memory_space<vmem>>, %arg4: memref<128x128xf32, #tpu.memory_space<vmem>>, %arg5: memref<1x128xf32, #tpu.memory_space<vmem>>, %arg6: memref<1x128xf32, #tpu.memory_space<vmem>>, %arg7: memref<1x1xf32, #tpu.memory_space<vmem>>, %arg8: memref<1x1x8xf32, #tpu.memory_space<vmem>>) attributes {dimension_semantics = [#tpu.dimension_semantics<parallel>], iteration_bounds = array<i64: 1>, scalar_prefetch = 0 : i64, scratch_operands = 0 : i64, tpu.core_type = #tpu.core_type<tc>, window_params = [{transform_indices = @transform_0, window_bounds = array<i64: 8, 16>}, {pipeline_mode = #tpu.pipeline_mode<synchronous>, transform_indices = @transform_1, window_bounds = array<i64: 16, 128>}, {pipeline_mode = #tpu.pipeline_mode<synchronous>, transform_indices = @transform_2, window_bounds = array<i64: 1, 128>}, {pipeline_mode = #tpu.pipeline_mode<synchronous>, transform_indices = @transform_3, window_bounds = array<i64: 128, 128>}, {pipeline_mode = #tpu.pipeline_mode<synchronous>, transform_indices = @transform_4, window_bounds = array<i64: 1, 128>}, {pipeline_mode = #tpu.pipeline_mode<synchronous>, transform_indices = @transform_5, window_bounds = array<i64: 1, 128>}, {pipeline_mode = #tpu.pipeline_mode<synchronous>, transform_indices = @transform_6, window_bounds = array<i64: 1, 1>}, {transform_indices = @transform_7, window_bounds = array<i64: 1, 1, 8>}]} {
    %c0 = arith.constant 0 : index
    %c0_0 = arith.constant 0 : index
    %0 = vector.load %arg1[%c0, %c0_0] : memref<8x16xf32, #tpu.memory_space<vmem>>, vector<8x16xf32>
    %c0_1 = arith.constant 0 : index
    %c0_2 = arith.constant 0 : index
    %1 = vector.load %arg2[%c0_1, %c0_2] : memref<16x128xf32, #tpu.memory_space<vmem>>, vector<16x128xf32>
    %cst = arith.constant dense<0.000000e+00> : vector<8x128xf32>
    %2 = tpu.matmul %0, %1, %cst {dimension_numbers = #tpu.dot_dimension_numbers<[1], [0], [0], [1], [0, 0, 1, 1], [], []>} : vector<8x16xf32>, vector<16x128xf32>, vector<8x128xf32> -> vector<8x128xf32>
    %c0_3 = arith.constant 0 : index
    %c0_4 = arith.constant 0 : index
    %3 = vector.load %arg3[%c0_3, %c0_4] : memref<1x128xf32, #tpu.memory_space<vmem>>, vector<1x128xf32>
    %4 = vector.broadcast %3 : vector<1x128xf32> to vector<8x128xf32>
    %5 = arith.addf %2, %4 : vector<8x128xf32>
    %cst_5 = arith.constant 0.000000e+00 : f32
    %6 = vector.broadcast %cst_5 : f32 to vector<8x128xf32>
    %7 = arith.maximumf %5, %6 : vector<8x128xf32>
    %c0_6 = arith.constant 0 : index
    %c0_7 = arith.constant 0 : index
    %8 = vector.load %arg4[%c0_6, %c0_7] : memref<128x128xf32, #tpu.memory_space<vmem>>, vector<128x128xf32>
    %cst_8 = arith.constant dense<0.000000e+00> : vector<8x128xf32>
    %9 = tpu.matmul %7, %8, %cst_8 {dimension_numbers = #tpu.dot_dimension_numbers<[1], [0], [0], [1], [0, 0, 1, 1], [], []>} : vector<8x128xf32>, vector<128x128xf32>, vector<8x128xf32> -> vector<8x128xf32>
    %c0_9 = arith.constant 0 : index
    %c0_10 = arith.constant 0 : index
    %10 = vector.load %arg5[%c0_9, %c0_10] : memref<1x128xf32, #tpu.memory_space<vmem>>, vector<1x128xf32>
    %11 = vector.broadcast %10 : vector<1x128xf32> to vector<8x128xf32>
    %12 = arith.addf %9, %11 : vector<8x128xf32>
    %cst_11 = arith.constant 0.000000e+00 : f32
    %13 = vector.broadcast %cst_11 : f32 to vector<8x128xf32>
    %14 = arith.maximumf %12, %13 : vector<8x128xf32>
    %c0_12 = arith.constant 0 : index
    %c0_13 = arith.constant 0 : index
    %15 = vector.load %arg6[%c0_12, %c0_13] : memref<1x128xf32, #tpu.memory_space<vmem>>, vector<1x128xf32>
    %16 = vector.broadcast %15 : vector<1x128xf32> to vector<8x128xf32>
    %17 = arith.mulf %14, %16 : vector<8x128xf32>
    %cst_14 = arith.constant dense<0.000000e+00> : vector<8xf32>
    %18 = vector.multi_reduction <add>, %17, %cst_14 [1] : vector<8x128xf32> to vector<8xf32>
    %19 = vector.shape_cast %18 : vector<8xf32> to vector<1x1x8xf32>
    %c0_15 = arith.constant 0 : index
    %c0_16 = arith.constant 0 : index
    %20 = vector.load %arg7[%c0_15, %c0_16] : memref<1x1xf32, #tpu.memory_space<vmem>>, vector<1x1xf32>
    %21 = vector.shape_cast %20 : vector<1x1xf32> to vector<1x1x1xf32>
    %22 = vector.broadcast %21 : vector<1x1x1xf32> to vector<1x1x8xf32>
    %23 = arith.addf %19, %22 : vector<1x1x8xf32>
    %c0_17 = arith.constant 0 : index
    %c0_18 = arith.constant 0 : index
    %c0_19 = arith.constant 0 : index
    %24 = vector.load %arg8[%c0_17, %c0_18, %c0_19] : memref<1x1x8xf32, #tpu.memory_space<vmem>>, vector<1x1x8xf32>
    tpu.vector_store %arg8[%c0_17, %c0_18, %c0_19], %23 {strides = array<i32>} : memref<1x1x8xf32, #tpu.memory_space<vmem>>, vector<1x1x8xf32>,
    return
  }
  func.func @transform_0(%arg0: i32) -> (i32, i32) {
    %c0_i32 = arith.constant 0 : i32
    %c0_i32_0 = arith.constant 0 : i32
    return %arg0, %c0_i32 : i32, i32
  }
  func.func @transform_1(%arg0: i32) -> (i32, i32) {
    %c0_i32 = arith.constant 0 : i32
    %c0_i32_0 = arith.constant 0 : i32
    %c0_i32_1 = arith.constant 0 : i32
    return %c0_i32, %c0_i32_0 : i32, i32
  }
  func.func @transform_2(%arg0: i32) -> (i32, i32) {
    %c0_i32 = arith.constant 0 : i32
    %c0_i32_0 = arith.constant 0 : i32
    %c0_i32_1 = arith.constant 0 : i32
    return %c0_i32, %c0_i32_0 : i32, i32
  }
  func.func @transform_3(%arg0: i32) -> (i32, i32) {
    %c0_i32 = arith.constant 0 : i32
    %c0_i32_0 = arith.constant 0 : i32
    %c0_i32_1 = arith.constant 0 : i32
    return %c0_i32, %c0_i32_0 : i32, i32
  }
  func.func @transform_4(%arg0: i32) -> (i32, i32) {
    %c0_i32 = arith.constant 0 : i32
    %c0_i32_0 = arith.constant 0 : i32
    %c0_i32_1 = arith.constant 0 : i32
    return %c0_i32, %c0_i32_0 : i32, i32
  }
  func.func @transform_5(%arg0: i32) -> (i32, i32) {
    %c0_i32 = arith.constant 0 : i32
    %c0_i32_0 = arith.constant 0 : i32
    %c0_i32_1 = arith.constant 0 : i32
    return %c0_i32, %c0_i32_0 : i32, i32
  }
  func.func @transform_6(%arg0: i32) -> (i32, i32) {
    %c0_i32 = arith.constant 0 : i32
    %c0_i32_0 = arith.constant 0 : i32
    %c0_i32_1 = arith.constant 0 : i32
    return %c0_i32, %c0_i32_0 : i32, i32
  }
  func.func @transform_7(%arg0: i32) -> (i32, i32, i32) {
    %c0_i32 = arith.constant 0 : i32
    %c0_i32_0 = arith.constant 0 : i32
    %c0_i32_1 = arith.constant 0 : i32
    return %arg0, %c0_i32, %c0_i32_0 : i32, i32, i32
  }
}

</mosaic_0001>

<llo_original>
// kernel: tpu_custom_call.1
$region0: #{tpu_custom_call.1}
  #allocation0 [shape = 'u32[]', space=smem, size = 0x4, offset = 0x4, fixed_abs, tag = 'smem constant byte address 0x4 - core index']
  #allocation1 [shape = 'u32[144,128]{1,0:T(1,128)}', space=vmem, size = 0x12000, scoped, tag = 'internal scratch']
  #allocation2 [shape = 'f32[1,1]{1,0:T(1,128)S(1)}', space=vmem, size = 0x200, scoped, tag = 'scoped memory for tpu_custom_call.1']
  %s0 = inlined_call_operand.hbm [shape: f32[8,16], index: 0, kind: input, shape index: {}]
  %s1 = inlined_call_operand.hbm [shape: f32[16,128], index: 1, kind: input, shape index: {}]
  %s2 = inlined_call_operand.vmem [shape: f32[1,128], index: 2, kind: input, shape index: {}]
  %s3 = inlined_call_operand.hbm [shape: f32[128,128], index: 3, kind: input, shape index: {}]
  %s4 = inlined_call_operand.vmem [shape: f32[1,128], index: 4, kind: input, shape index: {}]
  %s5 = inlined_call_operand.vmem [shape: f32[1,128], index: 5, kind: input, shape index: {}]
  %s6 = inlined_call_operand.<no memory space> [shape: f32[1,1], index: 6, kind: input, shape index: {}]
  %s7 = inlined_call_operand.hbm [shape: f32[1,1,8], index: 7, kind: output, shape index: {}]
  %s8 = sld [smem:[#allocation0]]
  $region50: #{tpu_custom_call.1} parent=0
    _
  %s10 = ssub.s32 1, %s8
  %s11 = scalar_select 0, %s10, %s8
  %v12 = vstv %s6
  %13 = vst [vmem:[#allocation2] sm:$0x1] %v12
  $region1: #{tpu_custom_call.1} parent=0
    #allocation3 [shape = 'u8[4096]{0}', space=vmem, size = 0x1000, scoped, tag = 'input window, operand 0, single buffered']
    #allocation4 [shape = 's32[1]{0}', space=sflag, size = 0x4, scoped, tag = 'scoped memory for tpu_custom_call.1']
    #allocation5 [shape = 's32[1]{0}', space=sflag, size = 0x4, scoped, tag = 'scoped memory for tpu_custom_call.1']
    #allocation6 [shape = 'u8[8192]{0}', space=vmem, size = 0x2000, scoped, tag = 'input window, operand 1, single buffered']
    #allocation7 [shape = 's32[1]{0}', space=sflag, size = 0x4, scoped, tag = 'scoped memory for tpu_custom_call.1']
    #allocation8 [shape = 'u8[65536]{0}', space=vmem, size = 0x10000, scoped, tag = 'input window, operand 3, single buffered']
    #allocation9 [shape = 'u8[512]{0}', space=vmem, size = 0x400, scoped, tag = 'output window, operand 0, single buffered']
    %14 = vsyncpa [#allocation4], 0
    %15 = vsyncpa [#allocation7], 0
    %16 = vsyncpa [#allocation5], 0
    // Predicated region
    $region2: #{tpu_custom_call.1} parent=1 // pred_check
      _
    $region3: #{tpu_custom_call.1} parent=1 // pred_check_branch
      %18 = sbr.rel (0) target = $region5
    $region4: #{tpu_custom_call.1} parent=1 // pred_region
      %s20 = ssub.s32 128, 128
      %21 = vsyncadd [#allocation4], %s20
      %s23 = sshll.u32 [#allocation3], 4
      %s24 = int_to_ptr.vmem [resolvable:$true] %s23
      %26 = dma.hbm_to_vmem [thread:$0]  %s0, 128, %s24, [#allocation4]
    $region5: #{tpu_custom_call.1} parent=1 // pred_fallthru
      _
    // Predicated region
    $region6: #{tpu_custom_call.1} parent=1 // pred_check
      _
    $region7: #{tpu_custom_call.1} parent=1 // pred_check_branch
      %28 = sbr.rel (0) target = $region9
    $region8: #{tpu_custom_call.1} parent=1 // pred_region
      %s30 = ssub.s32 256, 256
      %31 = vsyncadd [#allocation7], %s30
      %s32 = sshll.u32 [#allocation6], 4
      %s33 = int_to_ptr.vmem [resolvable:$true] %s32
      %38 = dma.hbm_to_vmem [thread:$0]  %s1, 256, %s33, [#allocation7], 128, 128, 8
    $region9: #{tpu_custom_call.1} parent=1 // pred_fallthru
      _
    // Predicated region
    $region10: #{tpu_custom_call.1} parent=1 // pred_check
      _
    $region11: #{tpu_custom_call.1} parent=1 // pred_check_branch
      %40 = sbr.rel (0) target = $region13
    $region12: #{tpu_custom_call.1} parent=1 // pred_region
      _
    $region13: #{tpu_custom_call.1} parent=1 // pred_fallthru
      _
    // Predicated region
    $region14: #{tpu_custom_call.1} parent=1 // pred_check
      _
    $region15: #{tpu_custom_call.1} parent=1 // pred_check_branch
      %42 = sbr.rel (0) target = $region17
    $region16: #{tpu_custom_call.1} parent=1 // pred_region
      %s44 = ssub.s32 2048, 2048
      %45 = vsyncadd [#allocation7], %s44
      %s46 = sshll.u32 [#allocation8], 4
      %s47 = int_to_ptr.vmem [resolvable:$true] %s46
      %52 = dma.hbm_to_vmem [thread:$0]  %s3, 2048, %s47, [#allocation7], 128, 128, 8
    $region17: #{tpu_custom_call.1} parent=1 // pred_fallthru
      _
    // Predicated region
    $region18: #{tpu_custom_call.1} parent=1 // pred_check
      _
    $region19: #{tpu_custom_call.1} parent=1 // pred_check_branch
      %54 = sbr.rel (0) target = $region21
    $region20: #{tpu_custom_call.1} parent=1 // pred_region
      _
    $region21: #{tpu_custom_call.1} parent=1 // pred_fallthru
      _
    // Predicated region
    $region22: #{tpu_custom_call.1} parent=1 // pred_check
      _
    $region23: #{tpu_custom_call.1} parent=1 // pred_check_branch
      %56 = sbr.rel (0) target = $region25
    $region24: #{tpu_custom_call.1} parent=1 // pred_region
      _
    $region25: #{tpu_custom_call.1} parent=1 // pred_fallthru
      _
    // Predicated region
    $region26: #{tpu_custom_call.1} parent=1 // pred_check
      _
    $region27: #{tpu_custom_call.1} parent=1 // pred_check_branch
      %58 = sbr.rel (0) target = $region29
    $region28: #{tpu_custom_call.1} parent=1 // pred_region
      _
    $region29: #{tpu_custom_call.1} parent=1 // pred_fallthru
      _
    // Predicated region
    $region30: #{tpu_custom_call.1} parent=1 // pred_check
      _
    $region31: #{tpu_custom_call.1} parent=1 // pred_check_branch
      %60 = sbr.rel (0) target = $region33
    $region32: #{tpu_custom_call.1} parent=1 // pred_region
      %61 = dma.done [#allocation4], 128
    $region33: #{tpu_custom_call.1} parent=1 // pred_fallthru
      _
    // Predicated region
    $region34: #{tpu_custom_call.1} parent=1 // pred_check
      _
    $region35: #{tpu_custom_call.1} parent=1 // pred_check_branch
      %63 = sbr.rel (0) target = $region37
    $region36: #{tpu_custom_call.1} parent=1 // pred_region
      %64 = dma.done [#allocation7], 256
    $region37: #{tpu_custom_call.1} parent=1 // pred_fallthru
      _
    // Predicated region
    $region38: #{tpu_custom_call.1} parent=1 // pred_check
      _
    $region39: #{tpu_custom_call.1} parent=1 // pred_check_branch
      %66 = sbr.rel (0) target = $region41
    $region40: #{tpu_custom_call.1} parent=1 // pred_region
      %67 = dma.done [#allocation7], 2048
    $region41: #{tpu_custom_call.1} parent=1 // pred_fallthru
      _
    %v68 = vld [vmem:[#allocation3] sm:$0xff]
    %v69 = vld [vmem:[#allocation6] sm:$0xff]
    %v70 = vld [vmem:[#allocation6 + $0x8] sm:$0xff]
    %v71 = vld [vmem:[%s2] sm:$0x1]
    %v73 = vlaneseq
    %v74 = vshrl.u32 %v73, 7
    %v75 = vsub.s32 0, %v74
    %v76 = vrot.slane %v71, %v75
    %vm78 = vcmask 130048
    %v80 = vsel %vm78, %v68, 0
    %82 = vmatprep.subr.mxu0 0.0
    %83 = vmatpush1.msra.mxu0 %v69
    %84 = vmatprep.subr.mxu0 0.0
    %85 = vmatpush1.msra.mxu0 %v70
    %86 = vmatprep.subr.mxu0 0.0
    %87 = vmatpush1.msra.mxu0 0.0
    %88 = vmatprep.subr.mxu0 0.0
    %89 = vmatpush1.msra.mxu0 0.0
    %90 = vmatprep.subr.mxu0 0.0
    %91 = vmatpush1.msra.mxu0 0.0
    %92 = vmatprep.subr.mxu0 0.0
    %93 = vmatpush1.msra.mxu0 0.0
    %94 = vmatprep.subr.mxu0 0.0
    %95 = vmatpush1.msra.mxu0 0.0
    %96 = vmatprep.subr.mxu0 0.0
    %97 = vmatpush1.msra.mxu0 0.0
    %98 = vmatprep.subr.mxu0 0.0
    %99 = vmatpush1.msra.mxu0 0.0
    %100 = vmatprep.subr.mxu0 0.0
    %101 = vmatpush1.msra.mxu0 0.0
    %102 = vmatprep.subr.mxu0 0.0
    %103 = vmatpush1.msra.mxu0 0.0
    %104 = vmatprep.subr.mxu0 0.0
    %105 = vmatpush1.msra.mxu0 0.0
    %106 = vmatprep.subr.mxu0 0.0
    %107 = vmatpush1.msra.mxu0 0.0
    %108 = vmatprep.subr.mxu0 0.0
    %109 = vmatpush1.msra.mxu0 0.0
    %110 = vmatprep.subr.mxu0 0.0
    %111 = vmatpush1.msra.mxu0 0.0
    %112 = vmatprep.subr.mxu0 0.0
    %113 = vmatpush1.msra.mxu0 0.0
    %114 = vmatprep.subr.mxu0 0.0
    %115 = vmatpush1.msra.mxu0 0.0
    %116 = vmatprep.subr.mxu0 0.0
    %117 = vmatpush1.msra.mxu0 0.0
    %118 = vmatprep.subr.mxu0 0.0
    %119 = vmatpush1.msra.mxu0 0.0
    %120 = vmatprep.subr.mxu0 0.0
    %121 = vmatpush1.msra.mxu0 0.0
    %122 = vmatprep.subr.mxu0 0.0
    %123 = vmatpush1.msra.mxu0 0.0
    %124 = vmatprep.subr.mxu0 0.0
    %125 = vmatpush1.msra.mxu0 0.0
    %126 = vmatprep.subr.mxu0 0.0
    %127 = vmatpush1.msra.mxu0 0.0
    %128 = vmatprep.subr.mxu0 0.0
    %129 = vmatpush1.msra.mxu0 0.0
    %130 = vmatprep.subr.mxu0 0.0
    %131 = vmatpush1.msra.mxu0 0.0
    %132 = vmatprep.subr.mxu0 0.0
    %133 = vmatpush1.msra.mxu0 0.0
    %134 = vmatprep.subr.mxu0 0.0
    %135 = vmatpush1.msra.mxu0 0.0
    %136 = vmatprep.subr.mxu0 0.0
    %137 = vmatpush1.msra.mxu0 0.0
    %138 = vmatprep.subr.mxu0 0.0
    %139 = vmatpush1.msra.mxu0 0.0
    %140 = vmatprep.subr.mxu0 0.0
    %141 = vmatpush1.msra.mxu0 0.0
    %142 = vmatprep.subr.mxu0 0.0
    %143 = vmatpush1.msra.mxu0 0.0
    %144 = vmatprep.subr.mxu0 0.0
    %145 = vmatpush1.msra.mxu0 0.0
    %146 = vmatprep.mubr.f32.mxu0 0.0
    %147 = vmatmul.mubr.f32.gmra.mrb[0].mxu0 %v80
    %v148 = vpop.f32.mrb[0].mxu0
    %v149 = vadd.f32 %v76, %v148
    %v150 = vpop.f32.mrb[0].mxu0
    %151 = vdwg.mxu0
    %v152 = vmax.f32 %v149, 0.0
    %v153 = vld [vmem:[#allocation8] sm:$0xff]
    %v154 = vld [vmem:[#allocation8 + $0x8] sm:$0xff]
    %v155 = vld [vmem:[#allocation8 + $0x10] sm:$0xff]
    %v156 = vld [vmem:[#allocation8 + $0x18] sm:$0xff]
    %v157 = vld [vmem:[#allocation8 + $0x20] sm:$0xff]
    %v158 = vld [vmem:[#allocation8 + $0x28] sm:$0xff]
    %v159 = vld [vmem:[#allocation8 + $0x30] sm:$0xff]
    %v160 = vld [vmem:[#allocation8 + $0x38] sm:$0xff]
    %v161 = vld [vmem:[#allocation8 + $0x40] sm:$0xff]
    %v162 = vld [vmem:[#allocation8 + $0x48] sm:$0xff]
    %v163 = vld [vmem:[#allocation8 + $0x50] sm:$0xff]
    %v164 = vld [vmem:[#allocation8 + $0x58] sm:$0xff]
    %v165 = vld [vmem:[#allocation8 + $0x60] sm:$0xff]
    %v166 = vld [vmem:[#allocation8 + $0x68] sm:$0xff]
    %v167 = vld [vmem:[#allocation8 + $0x70] sm:$0xff]
    %v168 = vld [vmem:[#allocation8 + $0x78] sm:$0xff]
    %v169 = vld [vmem:[%s4] sm:$0x1]
    %v171 = vlaneseq
    %v172 = vshrl.u32 %v171, 7
    %v173 = vsub.s32 0, %v172
    %v174 = vrot.slane %v169, %v173
    %176 = vmatprep.subr.mxu0 0.0
    %177 = vmatpush1.msra.mxu0 %v153
    %178 = vmatprep.subr.mxu0 0.0
    %179 = vmatpush1.msra.mxu0 %v154
    %180 = vmatprep.subr.mxu0 0.0
    %181 = vmatpush1.msra.mxu0 %v155
    %182 = vmatprep.subr.mxu0 0.0
    %183 = vmatpush1.msra.mxu0 %v156
    %184 = vmatprep.subr.mxu0 0.0
    %185 = vmatpush1.msra.mxu0 %v157
    %186 = vmatprep.subr.mxu0 0.0
    %187 = vmatpush1.msra.mxu0 %v158
    %188 = vmatprep.subr.mxu0 0.0
    %189 = vmatpush1.msra.mxu0 %v159
    %190 = vmatprep.subr.mxu0 0.0
    %191 = vmatpush1.msra.mxu0 %v160
    %192 = vmatprep.subr.mxu0 0.0
    %193 = vmatpush1.msra.mxu0 %v161
    %194 = vmatprep.subr.mxu0 0.0
    %195 = vmatpush1.msra.mxu0 %v162
    %196 = vmatprep.subr.mxu0 0.0
    %197 = vmatpush1.msra.mxu0 %v163
    %198 = vmatprep.subr.mxu0 0.0
    %199 = vmatpush1.msra.mxu0 %v164
    %200 = vmatprep.subr.mxu0 0.0
    %201 = vmatpush1.msra.mxu0 %v165
    %202 = vmatprep.subr.mxu0 0.0
    %203 = vmatpush1.msra.mxu0 %v166
    %204 = vmatprep.subr.mxu0 0.0
    %205 = vmatpush1.msra.mxu0 %v167
    %206 = vmatprep.subr.mxu0 0.0
    %207 = vmatpush1.msra.mxu0 %v168
    %208 = vmatprep.subr.mxu0 0.0
    %209 = vmatpush1.msra.mxu0 0.0
    %210 = vmatprep.subr.mxu0 0.0
    %211 = vmatpush1.msra.mxu0 0.0
    %212 = vmatprep.subr.mxu0 0.0
    %213 = vmatpush1.msra.mxu0 0.0
    %214 = vmatprep.subr.mxu0 0.0
    %215 = vmatpush1.msra.mxu0 0.0
    %216 = vmatprep.subr.mxu0 0.0
    %217 = vmatpush1.msra.mxu0 0.0
    %218 = vmatprep.subr.mxu0 0.0
    %219 = vmatpush1.msra.mxu0 0.0
    %220 = vmatprep.subr.mxu0 0.0
    %221 = vmatpush1.msra.mxu0 0.0
    %222 = vmatprep.subr.mxu0 0.0
    %223 = vmatpush1.msra.mxu0 0.0
    %224 = vmatprep.subr.mxu0 0.0
    %225 = vmatpush1.msra.mxu0 0.0
    %226 = vmatprep.subr.mxu0 0.0
    %227 = vmatpush1.msra.mxu0 0.0
    %228 = vmatprep.subr.mxu0 0.0
    %229 = vmatpush1.msra.mxu0 0.0
    %230 = vmatprep.subr.mxu0 0.0
    %231 = vmatpush1.msra.mxu0 0.0
    %232 = vmatprep.subr.mxu0 0.0
    %233 = vmatpush1.msra.mxu0 0.0
    %234 = vmatprep.subr.mxu0 0.0
    %235 = vmatpush1.msra.mxu0 0.0
    %236 = vmatprep.subr.mxu0 0.0
    %237 = vmatpush1.msra.mxu0 0.0
    %238 = vmatprep.subr.mxu0 0.0
    %239 = vmatpush1.msra.mxu0 0.0
    %240 = vmatprep.mubr.f32.mxu0 0.0
    %241 = vmatmul.mubr.f32.gmra.mrb[0].mxu0 %v152
    %v242 = vpop.f32.mrb[0].mxu0
    %v243 = vadd.f32 %v174, %v242
    %v244 = vpop.f32.mrb[0].mxu0
    %245 = vdwg.mxu0
    %v246 = vmax.f32 %v243, 0.0
    %v247 = vld [vmem:[%s5] sm:$0x1]
    %v249 = vlaneseq
    %v250 = vshrl.u32 %v249, 7
    %v251 = vsub.s32 0, %v250
    %v252 = vrot.slane %v247, %v251
    %v254 = vmul.f32 %v246, %v252
    %255 = vadd.xlane.f32.xlu0 %v254
    %v256 = vpop.xlane.xlu0 %255
    %v257 = vld [vmem:[#allocation2] sm:$0x1]
    %259 = vset.pattern.permute.xlu0 0
    %260 = vperm.xlu0 %259, %v257
    %v261 = vpop.permute.xlu0 %260
    %v263 = vlaneseq
    %v264 = vshrl.u32 %v263, 7
    %v265 = vsub.s32 0, %v264
    %v266 = vrot.slane %v261, %v265
    %v267 = vadd.f32 %v256, %v266
    %v269 = vlaneseq
    %v270 = vand.u32 %v269, 127
    %v271 = vlaneseq
    %v272 = vshrl.u32 %v271, 7
    %v273 = vsub.s32 %v270, %v272
    %v274 = vrot.slane %v267, %v273
    %vm276 = vcmask 57344
    %277 = vst.msk [vmem:[#allocation9] sm:$0x1] %vm276, %v274
    // Predicated region
    $region42: #{tpu_custom_call.1} parent=1 // pred_check
      _
    $region43: #{tpu_custom_call.1} parent=1 // pred_check_branch
      %279 = sbr.rel (0) target = $region45
    $region44: #{tpu_custom_call.1} parent=1 // pred_region
      %s281 = ssub.s32 16, 16
      %282 = vsyncadd [#allocation5], %s281
      %s284 = sshll.u32 [#allocation9], 4
      %s285 = int_to_ptr.vmem [resolvable:$true] %s284
      %287 = dma.vmem_to_hbm [thread:$0]  %s285, 16, %s7, [#allocation5]
    $region45: #{tpu_custom_call.1} parent=1 // pred_fallthru
      _
    // Predicated region
    $region46: #{tpu_custom_call.1} parent=1 // pred_check
      _
    $region47: #{tpu_custom_call.1} parent=1 // pred_check_branch
      %289 = sbr.rel (0) target = $region49
    $region48: #{tpu_custom_call.1} parent=1 // pred_region
      %290 = dma.done [#allocation5], 16
    $region49: #{tpu_custom_call.1} parent=1 // pred_fallthru
      _
    %291 = vsyncpa [#allocation4], 1
    %292 = vsyncpa [#allocation7], 1
    %293 = vsyncpa [#allocation5], 1

// kernel: tpu_custom_call.1
$region0: #{tpu_custom_call.1}
  #allocation0 [shape = 'u32[]', space=smem, size = 0x4, offset = 0x4, fixed_abs, tag = 'smem constant byte address 0x4 - core index']
  #allocation1 [shape = 'u32[144,128]{1,0:T(1,128)}', space=vmem, size = 0x12000, scoped, tag = 'internal scratch']
  #allocation2 [shape = 'f32[1,1]{1,0:T(1,128)S(1)}', space=vmem, size = 0x200, scoped, tag = 'scoped memory for tpu_custom_call.1']
  %s0 = inlined_call_operand.hbm [shape: f32[8,16], index: 0, kind: input, shape index: {}]
  %s1 = inlined_call_operand.hbm [shape: f32[16,128], index: 1, kind: input, shape index: {}]
  %s2 = inlined_call_operand.vmem [shape: f32[1,128], index: 2, kind: input, shape index: {}]
  %s3 = inlined_call_operand.hbm [shape: f32[128,128], index: 3, kind: input, shape index: {}]
  %s4 = inlined_call_operand.vmem [shape: f32[1,128], index: 4, kind: input, shape index: {}]
  %s5 = inlined_call_operand.vmem [shape: f32[1,128], index: 5, kind: input, shape index: {}]
  %s6 = inlined_call_operand.<no memory space> [shape: f32[1,1], index: 6, kind: input, shape index: {}]
  %s7 = inlined_call_operand.hbm [shape: f32[1,1,8], index: 7, kind: output, shape index: {}]
  %s8 = sld [smem:[#allocation0]]
  $region50: #{tpu_custom_call.1} parent=0
    _
  %s10 = ssub.s32 1, %s8
  %s11 = scalar_select 0, %s10, %s8
  %v12 = vstv %s6
  %13 = vst [vmem:[#allocation2] sm:$0x1] %v12
  $region1: #{tpu_custom_call.1} parent=0
    #allocation3 [shape = 'u8[4096]{0}', space=vmem, size = 0x1000, scoped, tag = 'input window, operand 0, single buffered']
    #allocation4 [shape = 's32[1]{0}', space=sflag, size = 0x4, scoped, tag = 'scoped memory for tpu_custom_call.1']
    #allocation5 [shape = 's32[1]{0}', space=sflag, size = 0x4, scoped, tag = 'scoped memory for tpu_custom_call.1']
    #allocation6 [shape = 'u8[8192]{0}', space=vmem, size = 0x2000, scoped, tag = 'input window, operand 1, single buffered']
    #allocation7 [shape = 's32[1]{0}', space=sflag, size = 0x4, scoped, tag = 'scoped memory for tpu_custom_call.1']
    #allocation8 [shape = 'u8[65536]{0}', space=vmem, size = 0x10000, scoped, tag = 'input window, operand 3, single buffered']
    #allocation9 [shape = 'u8[512]{0}', space=vmem, size = 0x400, scoped, tag = 'output window, operand 0, single buffered']
    %14 = vsyncpa [#allocation4], 0
    %15 = vsyncpa [#allocation7], 0
    %16 = vsyncpa [#allocation5], 0
    // Predicated region
    $region2: #{tpu_custom_call.1} parent=1 // pred_check
      _
    $region3: #{tpu_custom_call.1} parent=1 // pred_check_branch
      %18 = sbr.rel (0) target = $region5
    $region4: #{tpu_custom_call.1} parent=1 // pred_region
      %s20 = ssub.s32 128, 128
      %21 = vsyncadd [#allocation4], %s20
      %s23 = sshll.u32 [#allocation3], 4
      %s24 = int_to_ptr.vmem [resolvable:$true] %s23
      %26 = dma.hbm_to_vmem [thread:$0]  %s0, 128, %s24, [#allocation4]
    $region5: #{tpu_custom_call.1} parent=1 // pred_fallthru
      _
    // Predicated region
    $region6: #{tpu_custom_call.1} parent=1 // pred_check
      _
    $region7: #{tpu_custom_call.1} parent=1 // pred_check_branch
      %28 = sbr.rel (0) target = $region9
    $region8: #{tpu_custom_call.1} parent=1 // pred_region
      %s30 = ssub.s32 256, 256
      %31 = vsyncadd [#allocation7], %s30
      %s32 = sshll.u32 [#allocation6], 4
      %s33 = int_to_ptr.vmem [resolvable:$true] %s32
      %38 = dma.hbm_to_vmem [thread:$0]  %s1, 256, %s33, [#allocation7], 128, 128, 8
    $region9: #{tpu_custom_call.1} parent=1 // pred_fallthru
      _
    // Predicated region
    $region10: #{tpu_custom_call.1} parent=1 // pred_check
      _
    $region11: #{tpu_custom_call.1} parent=1 // pred_check_branch
      %40 = sbr.rel (0) target = $region13
    $region12: #{tpu_custom_call.1} parent=1 // pred_region
      _
    $region13: #{tpu_custom_call.1} parent=1 // pred_fallthru
      _
    // Predicated region
    $region14: #{tpu_custom_call.1} parent=1 // pred_check
      _
    $region15: #{tpu_custom_call.1} parent=1 // pred_check_branch
      %42 = sbr.rel (0) target = $region17
    $region16: #{tpu_custom_call.1} parent=1 // pred_region
      %s44 = ssub.s32 2048, 2048
      %45 = vsyncadd [#allocation7], %s44
      %s46 = sshll.u32 [#allocation8], 4
      %s47 = int_to_ptr.vmem [resolvable:$true] %s46
      %52 = dma.hbm_to_vmem [thread:$0]  %s3, 2048, %s47, [#allocation7], 128, 128, 8
    $region17: #{tpu_custom_call.1} parent=1 // pred_fallthru
      _
    // Predicated region
    $region18: #{tpu_custom_call.1} parent=1 // pred_check
      _
    $region19: #{tpu_custom_call.1} parent=1 // pred_check_branch
      %54 = sbr.rel (0) target = $region21
    $region20: #{tpu_custom_call.1} parent=1 // pred_region
      _
    $region21: #{tpu_custom_call.1} parent=1 // pred_fallthru
      _
    // Predicated region
    $region22: #{tpu_custom_call.1} parent=1 // pred_check
      _
    $region23: #{tpu_custom_call.1} parent=1 // pred_check_branch
      %56 = sbr.rel (0) target = $region25
    $region24: #{tpu_custom_call.1} parent=1 // pred_region
      _
    $region25: #{tpu_custom_call.1} parent=1 // pred_fallthru
      _
    // Predicated region
    $region26: #{tpu_custom_call.1} parent=1 // pred_check
      _
    $region27: #{tpu_custom_call.1} parent=1 // pred_check_branch
      %58 = sbr.rel (0) target = $region29
    $region28: #{tpu_custom_call.1} parent=1 // pred_region
      _
    $region29: #{tpu_custom_call.1} parent=1 // pred_fallthru
      _
    // Predicated region
    $region30: #{tpu_custom_call.1} parent=1 // pred_check
      _
    $region31: #{tpu_custom_call.1} parent=1 // pred_check_branch
      %60 = sbr.rel (0) target = $region33
    $region32: #{tpu_custom_call.1} parent=1 // pred_region
      %61 = dma.done [#allocation4], 128
    $region33: #{tpu_custom_call.1} parent=1 // pred_fallthru
      _
    // Predicated region
    $region34: #{tpu_custom_call.1} parent=1 // pred_check
      _
    $region35: #{tpu_custom_call.1} parent=1 // pred_check_branch
      %63 = sbr.rel (0) target = $region37
    $region36: #{tpu_custom_call.1} parent=1 // pred_region
      %64 = dma.done [#allocation7], 256
    $region37: #{tpu_custom_call.1} parent=1 // pred_fallthru
      _
    // Predicated region
    $region38: #{tpu_custom_call.1} parent=1 // pred_check
      _
    $region39: #{tpu_custom_call.1} parent=1 // pred_check_branch
      %66 = sbr.rel (0) target = $region41
    $region40: #{tpu_custom_call.1} parent=1 // pred_region
      %67 = dma.done [#allocation7], 2048
    $region41: #{tpu_custom_call.1} parent=1 // pred_fallthru
      _
    %v68 = vld [vmem:[#allocation3] sm:$0xff]
    %v69 = vld [vmem:[#allocation6] sm:$0xff]
    %v70 = vld [vmem:[#allocation6 + $0x8] sm:$0xff]
    %v71 = vld [vmem:[%s2] sm:$0x1]
    %v73 = vlaneseq
    %v74 = vshrl.u32 %v73, 7
    %v75 = vsub.s32 0, %v74
    %v76 = vrot.slane %v71, %v75
    %vm78 = vcmask 130048
    %v80 = vsel %vm78, %v68, 0
    %82 = vmatprep.subr.mxu0 0.0
    %83 = vmatpush1.msra.mxu0 %v69
    %84 = vmatprep.subr.mxu0 0.0
    %85 = vmatpush1.msra.mxu0 %v70
    %86 = vmatprep.subr.mxu0 0.0
    %87 = vmatpush1.msra.mxu0 0.0
    %88 = vmatprep.subr.mxu0 0.0
    %89 = vmatpush1.msra.mxu0 0.0
    %90 = vmatprep.subr.mxu0 0.0
    %91 = vmatpush1.msra.mxu0 0.0
    %92 = vmatprep.subr.mxu0 0.0
    %93 = vmatpush1.msra.mxu0 0.0
    %94 = vmatprep.subr.mxu0 0.0
    %95 = vmatpush1.msra.mxu0 0.0
    %96 = vmatprep.subr.mxu0 0.0
    %97 = vmatpush1.msra.mxu0 0.0
    %98 = vmatprep.subr.mxu0 0.0
    %99 = vmatpush1.msra.mxu0 0.0
    %100 = vmatprep.subr.mxu0 0.0
    %101 = vmatpush1.msra.mxu0 0.0
    %102 = vmatprep.subr.mxu0 0.0
    %103 = vmatpush1.msra.mxu0 0.0
    %104 = vmatprep.subr.mxu0 0.0
    %105 = vmatpush1.msra.mxu0 0.0
    %106 = vmatprep.subr.mxu0 0.0
    %107 = vmatpush1.msra.mxu0 0.0
    %108 = vmatprep.subr.mxu0 0.0
    %109 = vmatpush1.msra.mxu0 0.0
    %110 = vmatprep.subr.mxu0 0.0
    %111 = vmatpush1.msra.mxu0 0.0
    %112 = vmatprep.subr.mxu0 0.0
    %113 = vmatpush1.msra.mxu0 0.0
    %114 = vmatprep.subr.mxu0 0.0
    %115 = vmatpush1.msra.mxu0 0.0
    %116 = vmatprep.subr.mxu0 0.0
    %117 = vmatpush1.msra.mxu0 0.0
    %118 = vmatprep.subr.mxu0 0.0
    %119 = vmatpush1.msra.mxu0 0.0
    %120 = vmatprep.subr.mxu0 0.0
    %121 = vmatpush1.msra.mxu0 0.0
    %122 = vmatprep.subr.mxu0 0.0
    %123 = vmatpush1.msra.mxu0 0.0
    %124 = vmatprep.subr.mxu0 0.0
    %125 = vmatpush1.msra.mxu0 0.0
    %126 = vmatprep.subr.mxu0 0.0
    %127 = vmatpush1.msra.mxu0 0.0
    %128 = vmatprep.subr.mxu0 0.0
    %129 = vmatpush1.msra.mxu0 0.0
    %130 = vmatprep.subr.mxu0 0.0
    %131 = vmatpush1.msra.mxu0 0.0
    %132 = vmatprep.subr.mxu0 0.0
    %133 = vmatpush1.msra.mxu0 0.0
    %134 = vmatprep.subr.mxu0 0.0
    %135 = vmatpush1.msra.mxu0 0.0
    %136 = vmatprep.subr.mxu0 0.0
    %137 = vmatpush1.msra.mxu0 0.0
    %138 = vmatprep.subr.mxu0 0.0
    %139 = vmatpush1.msra.mxu0 0.0
    %140 = vmatprep.subr.mxu0 0.0
    %141 = vmatpush1.msra.mxu0 0.0
    %142 = vmatprep.subr.mxu0 0.0
    %143 = vmatpush1.msra.mxu0 0.0
    %144 = vmatprep.subr.mxu0 0.0
    %145 = vmatpush1.msra.mxu0 0.0
    %146 = vmatprep.mubr.f32.mxu0 0.0
    %147 = vmatmul.mubr.f32.gmra.mrb[0].mxu0 %v80
    %v148 = vpop.f32.mrb[0].mxu0
    %v149 = vadd.f32 %v76, %v148
    %v150 = vpop.f32.mrb[0].mxu0
    %151 = vdwg.mxu0
    %v152 = vmax.f32 %v149, 0.0
    %v153 = vld [vmem:[#allocation8] sm:$0xff]
    %v154 = vld [vmem:[#allocation8 + $0x8] sm:$0xff]
    %v155 = vld [vmem:[#allocation8 + $0x10] sm:$0xff]
    %v156 = vld [vmem:[#allocation8 + $0x18] sm:$0xff]
    %v157 = vld [vmem:[#allocation8 + $0x20] sm:$0xff]
    %v158 = vld [vmem:[#allocation8 + $0x28] sm:$0xff]
    %v159 = vld [vmem:[#allocation8 + $0x30] sm:$0xff]
    %v160 = vld [vmem:[#allocation8 + $0x38] sm:$0xff]
    %v161 = vld [vmem:[#allocation8 + $0x40] sm:$0xff]
    %v162 = vld [vmem:[#allocation8 + $0x48] sm:$0xff]
    %v163 = vld [vmem:[#allocation8 + $0x50] sm:$0xff]
    %v164 = vld [vmem:[#allocation8 + $0x58] sm:$0xff]
    %v165 = vld [vmem:[#allocation8 + $0x60] sm:$0xff]
    %v166 = vld [vmem:[#allocation8 + $0x68] sm:$0xff]
    %v167 = vld [vmem:[#allocation8 + $0x70] sm:$0xff]
    %v168 = vld [vmem:[#allocation8 + $0x78] sm:$0xff]
    %v169 = vld [vmem:[%s4] sm:$0x1]
    %v171 = vlaneseq
    %v172 = vshrl.u32 %v171, 7
    %v173 = vsub.s32 0, %v172
    %v174 = vrot.slane %v169, %v173
    %176 = vmatprep.subr.mxu0 0.0
    %177 = vmatpush1.msra.mxu0 %v153
    %178 = vmatprep.subr.mxu0 0.0
    %179 = vmatpush1.msra.mxu0 %v154
    %180 = vmatprep.subr.mxu0 0.0
    %181 = vmatpush1.msra.mxu0 %v155
    %182 = vmatprep.subr.mxu0 0.0
    %183 = vmatpush1.msra.mxu0 %v156
    %184 = vmatprep.subr.mxu0 0.0
    %185 = vmatpush1.msra.mxu0 %v157
    %186 = vmatprep.subr.mxu0 0.0
    %187 = vmatpush1.msra.mxu0 %v158
    %188 = vmatprep.subr.mxu0 0.0
    %189 = vmatpush1.msra.mxu0 %v159
    %190 = vmatprep.subr.mxu0 0.0
    %191 = vmatpush1.msra.mxu0 %v160
    %192 = vmatprep.subr.mxu0 0.0
    %193 = vmatpush1.msra.mxu0 %v161
    %194 = vmatprep.subr.mxu0 0.0
    %195 = vmatpush1.msra.mxu0 %v162
    %196 = vmatprep.subr.mxu0 0.0
    %197 = vmatpush1.msra.mxu0 %v163
    %198 = vmatprep.subr.mxu0 0.0
    %199 = vmatpush1.msra.mxu0 %v164
    %200 = vmatprep.subr.mxu0 0.0
    %201 = vmatpush1.msra.mxu0 %v165
    %202 = vmatprep.subr.mxu0 0.0
    %203 = vmatpush1.msra.mxu0 %v166
    %204 = vmatprep.subr.mxu0 0.0
    %205 = vmatpush1.msra.mxu0 %v167
    %206 = vmatprep.subr.mxu0 0.0
    %207 = vmatpush1.msra.mxu0 %v168
    %208 = vmatprep.subr.mxu0 0.0
    %209 = vmatpush1.msra.mxu0 0.0
    %210 = vmatprep.subr.mxu0 0.0
    %211 = vmatpush1.msra.mxu0 0.0
    %212 = vmatprep.subr.mxu0 0.0
    %213 = vmatpush1.msra.mxu0 0.0
    %214 = vmatprep.subr.mxu0 0.0
    %215 = vmatpush1.msra.mxu0 0.0
    %216 = vmatprep.subr.mxu0 0.0
    %217 = vmatpush1.msra.mxu0 0.0
    %218 = vmatprep.subr.mxu0 0.0
    %219 = vmatpush1.msra.mxu0 0.0
    %220 = vmatprep.subr.mxu0 0.0
    %221 = vmatpush1.msra.mxu0 0.0
    %222 = vmatprep.subr.mxu0 0.0
    %223 = vmatpush1.msra.mxu0 0.0
    %224 = vmatprep.subr.mxu0 0.0
    %225 = vmatpush1.msra.mxu0 0.0
    %226 = vmatprep.subr.mxu0 0.0
    %227 = vmatpush1.msra.mxu0 0.0
    %228 = vmatprep.subr.mxu0 0.0
    %229 = vmatpush1.msra.mxu0 0.0
    %230 = vmatprep.subr.mxu0 0.0
    %231 = vmatpush1.msra.mxu0 0.0
    %232 = vmatprep.subr.mxu0 0.0
    %233 = vmatpush1.msra.mxu0 0.0
    %234 = vmatprep.subr.mxu0 0.0
    %235 = vmatpush1.msra.mxu0 0.0
    %236 = vmatprep.subr.mxu0 0.0
    %237 = vmatpush1.msra.mxu0 0.0
    %238 = vmatprep.subr.mxu0 0.0
    %239 = vmatpush1.msra.mxu0 0.0
    %240 = vmatprep.mubr.f32.mxu0 0.0
    %241 = vmatmul.mubr.f32.gmra.mrb[0].mxu0 %v152
    %v242 = vpop.f32.mrb[0].mxu0
    %v243 = vadd.f32 %v174, %v242
    %v244 = vpop.f32.mrb[0].mxu0
    %245 = vdwg.mxu0
    %v246 = vmax.f32 %v243, 0.0
    %v247 = vld [vmem:[%s5] sm:$0x1]
    %v249 = vlaneseq
    %v250 = vshrl.u32 %v249, 7
    %v251 = vsub.s32 0, %v250
    %v252 = vrot.slane %v247, %v251
    %v254 = vmul.f32 %v246, %v252
    %255 = vadd.xlane.f32.xlu0 %v254
    %v256 = vpop.xlane.xlu0 %255
    %v257 = vld [vmem:[#allocation2] sm:$0x1]
    %259 = vset.pattern.permute.xlu0 0
    %260 = vperm.xlu0 %259, %v257
    %v261 = vpop.permute.xlu0 %260
    %v263 = vlaneseq
    %v264 = vshrl.u32 %v263, 7
    %v265 = vsub.s32 0, %v264
    %v266 = vrot.slane %v261, %v265
    %v267 = vadd.f32 %v256, %v266
    %v269 = vlaneseq
    %v270 = vand.u32 %v269, 127
    %v271 = vlaneseq
    %v272 = vshrl.u32 %v271, 7
    %v273 = vsub.s32 %v270, %v272
    %v274 = vrot.slane %v267, %v273
    %vm276 = vcmask 57344
    %277 = vst.msk [vmem:[#allocation9] sm:$0x1] %vm276, %v274
    // Predicated region
    $region42: #{tpu_custom_call.1} parent=1 // pred_check
      _
    $region43: #{tpu_custom_call.1} parent=1 // pred_check_branch
      %279 = sbr.rel (0) target = $region45
    $region44: #{tpu_custom_call.1} parent=1 // pred_region
      %s281 = ssub.s32 16, 16
      %282 = vsyncadd [#allocation5], %s281
      %s284 = sshll.u32 [#allocation9], 4
      %s285 = int_to_ptr.vmem [resolvable:$true] %s284
      %287 = dma.vmem_to_hbm [thread:$0]  %s285, 16, %s7, [#allocation5]
    $region45: #{tpu_custom_call.1} parent=1 // pred_fallthru
      _
    // Predicated region
    $region46: #{tpu_custom_call.1} parent=1 // pred_check
      _
    $region47: #{tpu_custom_call.1} parent=1 // pred_check_branch
      %289 = sbr.rel (0) target = $region49
    $region48: #{tpu_custom_call.1} parent=1 // pred_region
      %290 = dma.done [#allocation5], 16
    $region49: #{tpu_custom_call.1} parent=1 // pred_fallthru
      _
    %291 = vsyncpa [#allocation4], 1
    %292 = vsyncpa [#allocation7], 1
    %293 = vsyncpa [#allocation5], 1

</llo_original>
